<compile_context>
chip_gen: v7x
topology: tpu7x:2x2x1
jax: 0.10.0
libtpu: 0.0.40
codegen_flags: <defaults>
</compile_context>

<pallas_src>
import jax
import jax.numpy as jnp
from jax.experimental import pallas as pl
from jax.experimental.pallas import tpu as pltpu

_LANES = 128


def _round_up(x, m):
    return ((x + m - 1) // m) * m


def _linear11_kernel(wb_ref, x_ref, o_ref):
    # wb_ref: (2,) f32 in SMEM -> [weight, bias]; x_ref/o_ref: (tile_rows, 128) in VMEM.
    w = wb_ref[0]
    b = wb_ref[1]
    y = x_ref[...].astype(jnp.float32) * w + b
    o_ref[...] = y.astype(o_ref.dtype)


def linear11(x, weight, bias, *, tile_rows=8192):
    """y = x * weight + bias for x of shape (B, 1), matching torch.nn.Linear(1, 1)."""
    assert x.ndim == 2 and x.shape[-1] == 1, "expected (batch, 1) input"
    B = x.shape[0]
    dtype = x.dtype

    # Pack parameters into one small SMEM operand; keep them in f32 for the compute.
    wb = jnp.concatenate([weight.reshape(-1), bias.reshape(-1)]).astype(jnp.float32)

    # Lane-dense slab: pad the flat input only to the next multiple of 128 (<128 elems).
    padded = _round_up(max(B, 1), _LANES)
    pad = padded - B
    rows = padded // _LANES

    flat = x.reshape(-1)
    if pad:
        flat = jnp.pad(flat, (0, pad))      # only in the ragged-B path
    slab = flat.reshape(rows, _LANES)       # free bitcast when pad == 0

    # Tiling: large tiles to amortize per-grid-step overhead, but keep >= 2 balanced
    # tiles for mid-sized inputs so both v7x TensorCores ("parallel" axis) get work.
    if rows > tile_rows:
        tr = tile_rows
    elif rows >= 16:
        tr = max(8, _round_up(pl.cdiv(rows, 2), 8))
    else:
        tr = rows                            # single block, equal to full array extent
    num_tiles = pl.cdiv(rows, tr)            # last block may be ragged (Pallas masks it)

    out_slab = pl.pallas_call(
        _linear11_kernel,
        out_shape=jax.ShapeDtypeStruct((rows, _LANES), dtype),
        grid=(num_tiles,),
        in_specs=[
            pl.BlockSpec(memory_space=pltpu.SMEM),           # packed [w, b] scalars
            pl.BlockSpec((tr, _LANES), lambda i: (i, 0)),    # lane-dense input tile
        ],
        out_specs=pl.BlockSpec((tr, _LANES), lambda i: (i, 0)),
        compiler_params=pltpu.CompilerParams(
            dimension_semantics=("parallel",),               # shard rows across TCs (v7x)
        ),
    )(wb, slab)

    if pad:
        # Ragged batch: drop the (<128-element) padding tail.
        return out_slab.reshape(-1)[:B].reshape(B, 1)
    # Fast path: reshape back is a free bitcast, no slice copy.
    return out_slab.reshape(B, 1)


if __name__ == "__main__":
    key = jax.random.PRNGKey(0)
    kx, kw, kb, kx2, kx3 = jax.random.split(key, 5)

    # Deterministic "parameters" for Linear(1, 1).
    weight = jax.random.uniform(kw, (1, 1), jnp.float32, -1.0, 1.0)
    bias = jax.random.uniform(kb, (1,), jnp.float32, -1.0, 1.0)

    # Small batch of scalar features, matching the module's expected input.
    x = jax.random.normal(kx, (8, 1), jnp.float32)
    out = jax.block_until_ready(linear11(x, weight, bias))
    ref = x @ weight.T + bias
    assert out.shape == (8, 1)
    assert jnp.allclose(out, ref, atol=1e-6, rtol=1e-6)

    # Fast path: batch a multiple of 128 (no pad, no slice copy).
    x2 = jax.random.normal(kx2, (256, 1), jnp.float32)
    out2 = jax.block_until_ready(linear11(x2, weight, bias))
    ref2 = x2 @ weight.T + bias
    assert out2.shape == x2.shape
    assert jnp.allclose(out2, ref2, atol=1e-6, rtol=1e-6)

    # Ragged batch exercising the multi-tile grid, the <128-element padding path,
    # and a ragged (masked) last block.
    x3 = jax.random.normal(kx3, (2077, 1), jnp.float32)
    out3 = jax.block_until_ready(linear11(x3, weight, bias))
    ref3 = x3 @ weight.T + bias
    assert out3.shape == x3.shape
    assert jnp.allclose(out3, ref3, atol=1e-6, rtol=1e-6)

    print("KERNEL_OK")
</pallas_src>

<mosaic_0001>
module attributes {stable_mosaic.version = 11 : i64} {
  func.func @_linear11_kernel(%arg0: i32, %arg1: memref<2xf32, #tpu.memory_space<smem>>, %arg2: memref<1x128xf32, #tpu.memory_space<vmem>>, %arg3: memref<1x128xf32, #tpu.memory_space<vmem>>) attributes {dimension_semantics = [#tpu.dimension_semantics<parallel>], iteration_bounds = array<i64: 1>, scalar_prefetch = 0 : i64, scratch_operands = 0 : i64, tpu.core_type = #tpu.core_type<tc>, window_params = [{transform_indices = @transform_0, window_bounds = array<i64: 2>}, {transform_indices = @transform_1, window_bounds = array<i64: 1, 128>}, {transform_indices = @transform_2, window_bounds = array<i64: 1, 128>}]} {
    %c0 = arith.constant 0 : index
    %0 = memref.load %arg1[%c0] : memref<2xf32, #tpu.memory_space<smem>>
    %c1 = arith.constant 1 : index
    %1 = memref.load %arg1[%c1] : memref<2xf32, #tpu.memory_space<smem>>
    %c0_0 = arith.constant 0 : index
    %c0_1 = arith.constant 0 : index
    %2 = vector.load %arg2[%c0_0, %c0_1] : memref<1x128xf32, #tpu.memory_space<vmem>>, vector<1x128xf32>
    %3 = vector.broadcast %0 : f32 to vector<1x128xf32>
    %4 = arith.mulf %2, %3 : vector<1x128xf32>
    %5 = vector.broadcast %1 : f32 to vector<1x128xf32>
    %6 = arith.addf %4, %5 : vector<1x128xf32>
    %c0_2 = arith.constant 0 : index
    %c0_3 = arith.constant 0 : index
    %7 = vector.load %arg3[%c0_2, %c0_3] : memref<1x128xf32, #tpu.memory_space<vmem>>, vector<1x128xf32>
    tpu.vector_store %arg3[%c0_2, %c0_3], %6 {strides = array<i32>} : memref<1x128xf32, #tpu.memory_space<vmem>>, vector<1x128xf32>,
    return
  }
  func.func @transform_0(%arg0: i32) -> i32 {
    %c0_i32 = arith.constant 0 : i32
    %c0_i32_0 = arith.constant 0 : i32
    return %c0_i32 : i32
  }
  func.func @transform_1(%arg0: i32) -> (i32, i32) {
    %c0_i32 = arith.constant 0 : i32
    %c0_i32_0 = arith.constant 0 : i32
    return %arg0, %c0_i32 : i32, i32
  }
  func.func @transform_2(%arg0: i32) -> (i32, i32) {
    %c0_i32 = arith.constant 0 : i32
    %c0_i32_0 = arith.constant 0 : i32
    return %arg0, %c0_i32 : i32, i32
  }
}

</mosaic_0001>

<llo_original>
// kernel: tpu_custom_call.1
$region0: #{tpu_custom_call.1}
  #allocation0 [shape = 'u32[]', space=smem, size = 0x4, offset = 0x4, fixed_abs, tag = 'smem constant byte address 0x4 - core index']
  #allocation1 [shape = 'u32[144,128]{1,0:T(1,128)}', space=vmem, size = 0x12000, scoped, tag = 'internal scratch']
  %s0 = inlined_call_operand.hbm [shape: f32[2], index: 0, kind: input, shape index: {}]
  %s1 = inlined_call_operand.vmem [shape: f32[1,128], index: 1, kind: input, shape index: {}]
  %s2 = inlined_call_operand.hbm [shape: f32[1,128], index: 2, kind: output, shape index: {}]
  %s3 = sld [smem:[#allocation0]]
  $region22: #{tpu_custom_call.1} parent=0
    _
  %s5 = ssub.s32 1, %s3
  %s6 = scalar_select 0, %s5, %s3
  $region1: #{tpu_custom_call.1} parent=0
    #allocation2 [shape = 'u8[512]{0}', space=smem, size = 0x200, scoped, tag = 'input window, operand 0, single buffered']
    #allocation3 [shape = 's32[1]{0}', space=sflag, size = 0x4, scoped, tag = 'scoped memory for tpu_custom_call.1']
    #allocation4 [shape = 's32[1]{0}', space=sflag, size = 0x4, scoped, tag = 'scoped memory for tpu_custom_call.1']
    #allocation5 [shape = 'u8[512]{0}', space=vmem, size = 0x400, scoped, tag = 'output window, operand 0, single buffered']
    %7 = vsyncpa [#allocation4], 0
    %8 = vsyncpa [#allocation3], 0
    // Predicated region
    $region2: #{tpu_custom_call.1} parent=1 // pred_check
      _
    $region3: #{tpu_custom_call.1} parent=1 // pred_check_branch
      %10 = sbr.rel (0) target = $region5
    $region4: #{tpu_custom_call.1} parent=1 // pred_region
      %s12 = ssub.s32 16, 16
      %13 = vsyncadd [#allocation4], %s12
      %16 = dma.hbm_to_smem %s0, 16, [#allocation2], [#allocation4]
    $region5: #{tpu_custom_call.1} parent=1 // pred_fallthru
      _
    // Predicated region
    $region6: #{tpu_custom_call.1} parent=1 // pred_check
      _
    $region7: #{tpu_custom_call.1} parent=1 // pred_check_branch
      %18 = sbr.rel (0) target = $region9
    $region8: #{tpu_custom_call.1} parent=1 // pred_region
      _
    $region9: #{tpu_custom_call.1} parent=1 // pred_fallthru
      _
    // Predicated region
    $region10: #{tpu_custom_call.1} parent=1 // pred_check
      _
    $region11: #{tpu_custom_call.1} parent=1 // pred_check_branch
      %20 = sbr.rel (0) target = $region13
    $region12: #{tpu_custom_call.1} parent=1 // pred_region
      %21 = dma.done [#allocation4], 16
    $region13: #{tpu_custom_call.1} parent=1 // pred_fallthru
      _
    %22 = sfence
    %s23 = sld [smem:[#allocation2]]
    %s24 = sld [smem:[#allocation2 + $0x1]]
    %v25 = vld [vmem:[%s1] sm:$0x1]
    %v26 = vstv %s23
    %v27 = vmul.f32 %v25, %v26
    %v28 = vstv %s24
    %v29 = vadd.f32 %v27, %v28
    %30 = vst [vmem:[#allocation5] sm:$0x1] %v29
    // Predicated region
    $region14: #{tpu_custom_call.1} parent=1 // pred_check
      _
    $region15: #{tpu_custom_call.1} parent=1 // pred_check_branch
      %32 = sbr.rel (0) target = $region17
    $region16: #{tpu_custom_call.1} parent=1 // pred_region
      %s34 = ssub.s32 16, 16
      %35 = vsyncadd [#allocation3], %s34
      %s37 = sshll.u32 [#allocation5], 4
      %s38 = int_to_ptr.vmem [resolvable:$true] %s37
      %40 = dma.vmem_to_hbm [thread:$0]  %s38, 16, %s2, [#allocation3]
    $region17: #{tpu_custom_call.1} parent=1 // pred_fallthru
      _
    // Predicated region
    $region18: #{tpu_custom_call.1} parent=1 // pred_check
      _
    $region19: #{tpu_custom_call.1} parent=1 // pred_check_branch
      %42 = sbr.rel (0) target = $region21
    $region20: #{tpu_custom_call.1} parent=1 // pred_region
      %43 = dma.done [#allocation3], 16
    $region21: #{tpu_custom_call.1} parent=1 // pred_fallthru
      _
    %44 = vsyncpa [#allocation3], 1
    %45 = vsyncpa [#allocation4], 1

</llo_original>
